<compile_context>
chip_gen: v7x
topology: tpu7x:2x2x1
jax: 0.10.0
libtpu: 0.0.40
codegen_flags: <defaults>
</compile_context>

<pallas_src>
import jax
import jax.numpy as jnp
from jax.experimental import pallas as pl
from jax.experimental.pallas import tpu as pltpu


_SUBLANE = 8
_LANE = 128


def _round_up(x, m):
    return ((x + m - 1) // m) * m


# ----------------------------- kernels ---------------------------------------


def _linear_kernel_f32(x_ref, wt_ref, b_ref, o_ref):
    """Direct accumulation into the (f32) output tile; bias folded into init."""
    @pl.when(pl.program_id(2) == 0)
    def _init():
        o_ref[...] = jnp.broadcast_to(b_ref[...], o_ref.shape).astype(o_ref.dtype)

    o_ref[...] += jnp.dot(x_ref[...], wt_ref[...],
                          preferred_element_type=jnp.float32)


def _linear_kernel_acc(x_ref, wt_ref, b_ref, o_ref, acc_ref):
    """f32 scratch accumulator; used only when the output dtype is not f32."""
    k = pl.program_id(2)

    @pl.when(k == 0)
    def _init():
        acc_ref[...] = jnp.broadcast_to(
            b_ref[...].astype(jnp.float32), acc_ref.shape)

    acc_ref[...] += jnp.dot(x_ref[...], wt_ref[...],
                            preferred_element_type=jnp.float32)

    @pl.when(k == pl.num_programs(2) - 1)
    def _finalize():
        o_ref[...] = acc_ref[...].astype(o_ref.dtype)


# ------------------------- parameter preparation ------------------------------


def prepare_linear_params(w, b, *, tk_pref=1024):
    """One-time (init-time) prep: W^T in MXU-native [D_in, D_out] layout, with
    the K axis zero-padded to a K-tile multiple only if K tiling is needed."""
    assert tk_pref % _LANE == 0
    D_out, D_in = w.shape
    if D_in <= tk_pref:
        tk, Kp = D_in, D_in            # single full-K block, no padding
    else:
        tk = tk_pref                   # multiple of 128
        Kp = _round_up(D_in, tk)

    wt = w.T                           # [D_in, D_out] -> MXU-native layout
    if Kp != D_in:
        wt = jnp.zeros((Kp, D_out), w.dtype).at[:D_in, :].set(wt)
    bp = b.reshape(1, D_out)
    return wt, bp, tk


# ------------------------------ forward ---------------------------------------


def logistic_regression_forward(x, wt_p, b_p, tk, *, tm_pref=512, tn_pref=512):
    """x: [B, D_in]; wt_p: [Kp, D_out] (pre-transposed/padded); b_p: [1, D_out]."""
    B, D_in = x.shape
    Kp, D_out = wt_p.shape
    assert Kp % tk == 0 and Kp >= D_in

    # Pad ONLY the K axis of x (needed for reduction correctness; zeros add 0).
    if Kp != D_in:
        x = jnp.zeros((B, Kp), x.dtype).at[:, :D_in].set(x)

    # M tiling: no padding, no output slice. Small B -> single full-dim block;
    # large B -> at least two sublane-aligned tiles (so v7x's 2 TensorCores can
    # both be fed via the "parallel" axis); ragged last block is masked on store.
    if B <= 256:
        tm = B
    else:
        tm = min(tm_pref, _round_up((B + 1) // 2, _SUBLANE))

    # N tiling: single full-dim block when D_out is small (typical for this
    # model), otherwise lane-aligned tiles with a masked ragged edge.
    tn = D_out if D_out <= tn_pref else tn_pref

    grid = (pl.cdiv(B, tm), pl.cdiv(D_out, tn), Kp // tk)

    in_specs = [
        pl.BlockSpec((tm, tk), lambda i, j, k: (i, k)),   # x tile
        pl.BlockSpec((tk, tn), lambda i, j, k: (k, j)),   # W^T tile
        pl.BlockSpec((1, tn), lambda i, j, k: (0, j)),    # bias tile
    ]
    out_spec = pl.BlockSpec((tm, tn), lambda i, j, k: (i, j))

    # Explicit scoped-VMEM budget (double-buffered inputs + output + slack),
    # clamped to [32 MiB, 64 MiB] so it is valid on v5e / v6e / v7x alike.
    isz = jnp.dtype(x.dtype).itemsize
    need = 2 * (tm * tk + tk * tn + tn) * isz + 3 * tm * tn * 4
    vmem_limit = min(max(int(need * 1.5), 32 * 1024 * 1024), 64 * 1024 * 1024)

    compiler_params = pltpu.CompilerParams(
        dimension_semantics=("parallel", "parallel", "arbitrary"),
        vmem_limit_bytes=vmem_limit,
    )

    if x.dtype == jnp.float32:
        # Accumulate straight into the f32 output tile (no scratch, no copy).
        return pl.pallas_call(
            _linear_kernel_f32,
            out_shape=jax.ShapeDtypeStruct((B, D_out), jnp.float32),
            grid_spec=pltpu.PrefetchScalarGridSpec(
                num_scalar_prefetch=0, grid=grid,
                in_specs=in_specs, out_specs=out_spec),
            compiler_params=compiler_params,
        )(x, wt_p, b_p)

    # Non-f32 outputs (e.g. bf16): keep the f32 scratch accumulator path.
    return pl.pallas_call(
        _linear_kernel_acc,
        out_shape=jax.ShapeDtypeStruct((B, D_out), x.dtype),
        grid_spec=pltpu.PrefetchScalarGridSpec(
            num_scalar_prefetch=0, grid=grid,
            in_specs=in_specs, out_specs=out_spec,
            scratch_shapes=[pltpu.VMEM((tm, tn), jnp.float32)]),
        compiler_params=compiler_params,
    )(x, wt_p, b_p)


if __name__ == "__main__":
    # Small shapes implied by the module: input_dim=32, output_dim=16, batch=8.
    batch, input_dim, output_dim = 8, 32, 16

    key = jax.random.PRNGKey(0)
    kx, kw, kb = jax.random.split(key, 3)

    # Deterministic init (mimics nn.Linear uniform(-1/sqrt(in), 1/sqrt(in))).
    bound = 1.0 / (input_dim ** 0.5)
    w = jax.random.uniform(kw, (output_dim, input_dim), jnp.float32, -bound, bound)
    b = jax.random.uniform(kb, (output_dim,), jnp.float32, -bound, bound)
    x = jax.random.normal(kx, (batch, input_dim), jnp.float32)

    # Parameter prep happens ONCE (hoisted out of the per-call path).
    wt_p, b_p, tk = prepare_linear_params(w, b)

    out = logistic_regression_forward(x, wt_p, b_p, tk)
    out = jax.block_until_ready(out)

    # Sanity check against plain JAX reference.
    ref = x @ w.T + b
    assert out.shape == (batch, output_dim)
    assert jnp.allclose(out, ref, atol=1e-5, rtol=1e-5)

    print("KERNEL_OK")
</pallas_src>

<mosaic_0001>
module attributes {stable_mosaic.version = 11 : i64} {
  func.func @_linear_kernel_f32(%arg0: i32, %arg1: i32, %arg2: i32, %arg3: memref<8x32xf32, #tpu.memory_space<vmem>>, %arg4: memref<32x16xf32, #tpu.memory_space<vmem>>, %arg5: memref<1x16xf32, #tpu.memory_space<vmem>>, %arg6: memref<8x16xf32, #tpu.memory_space<vmem>>) attributes {dimension_semantics = [#tpu.dimension_semantics<parallel>, #tpu.dimension_semantics<parallel>, #tpu.dimension_semantics<arbitrary>], iteration_bounds = array<i64: 1, 1, 1>, scalar_prefetch = 0 : i64, scratch_operands = 0 : i64, tpu.core_type = #tpu.core_type<tc>, window_params = [{transform_indices = @transform_0, window_bounds = array<i64: 8, 32>}, {transform_indices = @transform_1, window_bounds = array<i64: 32, 16>}, {transform_indices = @transform_2, window_bounds = array<i64: 1, 16>}, {transform_indices = @transform_3, window_bounds = array<i64: 8, 16>}]} {
    %c0_i32 = arith.constant 0 : i32
    %0 = arith.cmpi eq, %arg2, %c0_i32 : i32
    %1 = arith.extui %0 : i1 to i32
    %c0_i32_0 = arith.constant 0 : i32
    %2 = arith.cmpi ne, %1, %c0_i32_0 : i32
    scf.if %2 {
      %c0_8 = arith.constant 0 : index
      %c0_9 = arith.constant 0 : index
      %9 = vector.load %arg5[%c0_8, %c0_9] : memref<1x16xf32, #tpu.memory_space<vmem>>, vector<1x16xf32>
      %10 = vector.shape_cast %9 : vector<1x16xf32> to vector<1x16xf32>
      %11 = vector.broadcast %10 : vector<1x16xf32> to vector<8x16xf32>
      %c0_10 = arith.constant 0 : index
      %c0_11 = arith.constant 0 : index
      %12 = vector.load %arg6[%c0_10, %c0_11] : memref<8x16xf32, #tpu.memory_space<vmem>>, vector<8x16xf32>
      tpu.vector_store %arg6[%c0_10, %c0_11], %11 {strides = array<i32>} : memref<8x16xf32, #tpu.memory_space<vmem>>, vector<8x16xf32>,
    } else {
    }
    %c0 = arith.constant 0 : index
    %c0_1 = arith.constant 0 : index
    %3 = vector.load %arg6[%c0, %c0_1] : memref<8x16xf32, #tpu.memory_space<vmem>>, vector<8x16xf32>
    %c0_2 = arith.constant 0 : index
    %c0_3 = arith.constant 0 : index
    %4 = vector.load %arg3[%c0_2, %c0_3] : memref<8x32xf32, #tpu.memory_space<vmem>>, vector<8x32xf32>
    %c0_4 = arith.constant 0 : index
    %c0_5 = arith.constant 0 : index
    %5 = vector.load %arg4[%c0_4, %c0_5] : memref<32x16xf32, #tpu.memory_space<vmem>>, vector<32x16xf32>
    %cst = arith.constant dense<0.000000e+00> : vector<8x16xf32>
    %6 = tpu.matmul %4, %5, %cst {dimension_numbers = #tpu.dot_dimension_numbers<[1], [0], [0], [1], [0, 0, 1, 1], [], []>} : vector<8x32xf32>, vector<32x16xf32>, vector<8x16xf32> -> vector<8x16xf32>
    %7 = arith.addf %3, %6 : vector<8x16xf32>
    %c0_6 = arith.constant 0 : index
    %c0_7 = arith.constant 0 : index
    %8 = vector.load %arg6[%c0_6, %c0_7] : memref<8x16xf32, #tpu.memory_space<vmem>>, vector<8x16xf32>
    tpu.vector_store %arg6[%c0_6, %c0_7], %7 {strides = array<i32>} : memref<8x16xf32, #tpu.memory_space<vmem>>, vector<8x16xf32>,
    return
  }
  func.func @transform_0(%arg0: i32, %arg1: i32, %arg2: i32) -> (i32, i32) {
    %c0_i32 = arith.constant 0 : i32
    return %arg0, %arg2 : i32, i32
  }
  func.func @transform_1(%arg0: i32, %arg1: i32, %arg2: i32) -> (i32, i32) {
    %c0_i32 = arith.constant 0 : i32
    return %arg2, %arg1 : i32, i32
  }
  func.func @transform_2(%arg0: i32, %arg1: i32, %arg2: i32) -> (i32, i32) {
    %c0_i32 = arith.constant 0 : i32
    %c0_i32_0 = arith.constant 0 : i32
    return %c0_i32, %arg1 : i32, i32
  }
  func.func @transform_3(%arg0: i32, %arg1: i32, %arg2: i32) -> (i32, i32) {
    %c0_i32 = arith.constant 0 : i32
    return %arg0, %arg1 : i32, i32
  }
}

</mosaic_0001>

<llo_original>
// kernel: tpu_custom_call.1
$region0: #{tpu_custom_call.1}
  #allocation0 [shape = 'u32[]', space=smem, size = 0x4, offset = 0x4, fixed_abs, tag = 'smem constant byte address 0x4 - core index']
  #allocation1 [shape = 'u32[144,128]{1,0:T(1,128)}', space=vmem, size = 0x12000, scoped, tag = 'internal scratch']
  %s0 = inlined_call_operand.vmem [shape: f32[8,32], index: 0, kind: input, shape index: {}]
  %s1 = inlined_call_operand.vmem [shape: f32[32,16], index: 1, kind: input, shape index: {}]
  %s2 = inlined_call_operand.vmem [shape: f32[1,16], index: 2, kind: input, shape index: {}]
  %s3 = inlined_call_operand.hbm [shape: f32[8,16], index: 3, kind: output, shape index: {}]
  %s4 = sld [smem:[#allocation0]]
  $region26: #{tpu_custom_call.1} parent=0
    _
  %s6 = ssub.s32 1, %s4
  %s7 = scalar_select 0, %s6, %s4
  $region1: #{tpu_custom_call.1} parent=0
    #allocation2 [shape = 'u8[4096]{0}', space=vmem, size = 0x1000, scoped, tag = 'output window, operand 0, single buffered']
    #allocation3 [shape = 's32[1]{0}', space=sflag, size = 0x4, scoped, tag = 'scoped memory for tpu_custom_call.1']
    %8 = vsyncpa [#allocation3], 0
    // Predicated region
    $region2: #{tpu_custom_call.1} parent=1 // pred_check
      _
    $region3: #{tpu_custom_call.1} parent=1 // pred_check_branch
      %10 = sbr.rel (0) target = $region5
    $region4: #{tpu_custom_call.1} parent=1 // pred_region
      _
    $region5: #{tpu_custom_call.1} parent=1 // pred_fallthru
      _
    // Predicated region
    $region6: #{tpu_custom_call.1} parent=1 // pred_check
      _
    $region7: #{tpu_custom_call.1} parent=1 // pred_check_branch
      %12 = sbr.rel (0) target = $region9
    $region8: #{tpu_custom_call.1} parent=1 // pred_region
      _
    $region9: #{tpu_custom_call.1} parent=1 // pred_fallthru
      _
    // Predicated region
    $region10: #{tpu_custom_call.1} parent=1 // pred_check
      _
    $region11: #{tpu_custom_call.1} parent=1 // pred_check_branch
      %14 = sbr.rel (0) target = $region13
    $region12: #{tpu_custom_call.1} parent=1 // pred_region
      _
    $region13: #{tpu_custom_call.1} parent=1 // pred_fallthru
      _
    %p15 = scmp.eq.s32.totalorder 0, 0
    // Predicated region
    $region14: #{tpu_custom_call.1} parent=1 // pred_check
      %p16 = pneg %p15
    $region15: #{tpu_custom_call.1} parent=1 // pred_check_branch
      %18 = sbr.rel (%p16) target = $region17
    $region16: #{tpu_custom_call.1} parent=1 // pred_region
      %v19 = vld [vmem:[%s2] sm:$0x1]
      %v21 = vlaneseq
      %v22 = vshrl.u32 %v21, 7
      %v23 = vsub.s32 0, %v22
      %v24 = vrot.slane %v19, %v23
      %vm26 = vcmask 130048
      %27 = vst.msk [vmem:[#allocation2] sm:$0xff] %vm26, %v24
    $region17: #{tpu_custom_call.1} parent=1 // pred_fallthru
      _
    %v28 = vld [vmem:[#allocation2] sm:$0xff]
    %v29 = vld [vmem:[%s0] sm:$0xff]
    %v30 = vld [vmem:[%s1] sm:$0xff]
    %v31 = vld [vmem:[%s1 + $0x8] sm:$0xff]
    %v32 = vld [vmem:[%s1 + $0x10] sm:$0xff]
    %v33 = vld [vmem:[%s1 + $0x18] sm:$0xff]
    %vm34 = vcmask 261120
    %v36 = vsel %vm34, %v29, 0
    %38 = vmatprep.subr.mxu0 0.0
    %39 = vmatpush1.msra.mxu0 %v30
    %40 = vmatprep.subr.mxu0 0.0
    %41 = vmatpush1.msra.mxu0 %v31
    %42 = vmatprep.subr.mxu0 0.0
    %43 = vmatpush1.msra.mxu0 %v32
    %44 = vmatprep.subr.mxu0 0.0
    %45 = vmatpush1.msra.mxu0 %v33
    %46 = vmatprep.subr.mxu0 0.0
    %47 = vmatpush1.msra.mxu0 0.0
    %48 = vmatprep.subr.mxu0 0.0
    %49 = vmatpush1.msra.mxu0 0.0
    %50 = vmatprep.subr.mxu0 0.0
    %51 = vmatpush1.msra.mxu0 0.0
    %52 = vmatprep.subr.mxu0 0.0
    %53 = vmatpush1.msra.mxu0 0.0
    %54 = vmatprep.subr.mxu0 0.0
    %55 = vmatpush1.msra.mxu0 0.0
    %56 = vmatprep.subr.mxu0 0.0
    %57 = vmatpush1.msra.mxu0 0.0
    %58 = vmatprep.subr.mxu0 0.0
    %59 = vmatpush1.msra.mxu0 0.0
    %60 = vmatprep.subr.mxu0 0.0
    %61 = vmatpush1.msra.mxu0 0.0
    %62 = vmatprep.subr.mxu0 0.0
    %63 = vmatpush1.msra.mxu0 0.0
    %64 = vmatprep.subr.mxu0 0.0
    %65 = vmatpush1.msra.mxu0 0.0
    %66 = vmatprep.subr.mxu0 0.0
    %67 = vmatpush1.msra.mxu0 0.0
    %68 = vmatprep.subr.mxu0 0.0
    %69 = vmatpush1.msra.mxu0 0.0
    %70 = vmatprep.subr.mxu0 0.0
    %71 = vmatpush1.msra.mxu0 0.0
    %72 = vmatprep.subr.mxu0 0.0
    %73 = vmatpush1.msra.mxu0 0.0
    %74 = vmatprep.subr.mxu0 0.0
    %75 = vmatpush1.msra.mxu0 0.0
    %76 = vmatprep.subr.mxu0 0.0
    %77 = vmatpush1.msra.mxu0 0.0
    %78 = vmatprep.subr.mxu0 0.0
    %79 = vmatpush1.msra.mxu0 0.0
    %80 = vmatprep.subr.mxu0 0.0
    %81 = vmatpush1.msra.mxu0 0.0
    %82 = vmatprep.subr.mxu0 0.0
    %83 = vmatpush1.msra.mxu0 0.0
    %84 = vmatprep.subr.mxu0 0.0
    %85 = vmatpush1.msra.mxu0 0.0
    %86 = vmatprep.subr.mxu0 0.0
    %87 = vmatpush1.msra.mxu0 0.0
    %88 = vmatprep.subr.mxu0 0.0
    %89 = vmatpush1.msra.mxu0 0.0
    %90 = vmatprep.subr.mxu0 0.0
    %91 = vmatpush1.msra.mxu0 0.0
    %92 = vmatprep.subr.mxu0 0.0
    %93 = vmatpush1.msra.mxu0 0.0
    %94 = vmatprep.subr.mxu0 0.0
    %95 = vmatpush1.msra.mxu0 0.0
    %96 = vmatprep.subr.mxu0 0.0
    %97 = vmatpush1.msra.mxu0 0.0
    %98 = vmatprep.subr.mxu0 0.0
    %99 = vmatpush1.msra.mxu0 0.0
    %100 = vmatprep.subr.mxu0 0.0
    %101 = vmatpush1.msra.mxu0 0.0
    %102 = vmatprep.mubr.f32.mxu0 0.0
    %103 = vmatmul.mubr.f32.gmra.mrb[0].mxu0 %v36
    %v104 = vpop.f32.mrb[0].mxu0
    %v105 = vadd.f32 0.0, %v104
    %v106 = vpop.f32.mrb[0].mxu0
    %107 = vdwg.mxu0
    %v108 = vadd.f32 %v28, %v105
    %vm109 = vcmask 130048
    %110 = vst.msk [vmem:[#allocation2] sm:$0xff] %vm109, %v108
    // Predicated region
    $region18: #{tpu_custom_call.1} parent=1 // pred_check
      _
    $region19: #{tpu_custom_call.1} parent=1 // pred_check_branch
      %112 = sbr.rel (0) target = $region21
    $region20: #{tpu_custom_call.1} parent=1 // pred_region
      %s114 = ssub.s32 128, 128
      %115 = vsyncadd [#allocation3], %s114
      %s117 = sshll.u32 [#allocation2], 4
      %s118 = int_to_ptr.vmem [resolvable:$true] %s117
      %120 = dma.vmem_to_hbm [thread:$0]  %s118, 128, %s3, [#allocation3]
    $region21: #{tpu_custom_call.1} parent=1 // pred_fallthru
      _
    // Predicated region
    $region22: #{tpu_custom_call.1} parent=1 // pred_check
      _
    $region23: #{tpu_custom_call.1} parent=1 // pred_check_branch
      %122 = sbr.rel (0) target = $region25
    $region24: #{tpu_custom_call.1} parent=1 // pred_region
      %123 = dma.done [#allocation3], 128
    $region25: #{tpu_custom_call.1} parent=1 // pred_fallthru
      _
    %124 = vsyncpa [#allocation3], 1

</llo_original>
